<compile_context>
chip_gen: v5e
topology: v5e:2x2
jax: 0.10.0
libtpu: 0.0.40
codegen_flags: <defaults>
</compile_context>

<pallas_src>
import math
from functools import partial

import numpy as np
import jax
import jax.numpy as jnp
from jax.experimental import pallas as pl
from jax.experimental.pallas import tpu as pltpu


# ---------------------------------------------------------------------------
# Host-side helpers
# ---------------------------------------------------------------------------
def _out_size(in_size: int, factor: float) -> int:
    # matches PyTorch: output_size = floor(input_size * scale_factor)
    return int(math.floor(in_size * factor))


def _interp_matrix(out_size: int, in_size: int) -> np.ndarray:
    """Dense (out_size, in_size) 1-D linear interpolation matrix, align_corners=True."""
    m = np.zeros((out_size, in_size), dtype=np.float32)
    if out_size == 1 or in_size == 1:
        m[:, 0] = 1.0
        return m
    scale = (in_size - 1) / (out_size - 1)
    for i in range(out_size):
        src = i * scale
        i0 = min(int(math.floor(src)), in_size - 1)
        i1 = min(i0 + 1, in_size - 1)
        w1 = np.float32(src - i0)
        m[i, i0] += np.float32(1.0) - w1
        m[i, i1] += w1
    return m


def _block_diag(m: np.ndarray, reps: int) -> np.ndarray:
    """reps copies of m on the diagonal: folds `reps` channels into one matmul."""
    o, i = m.shape
    bd = np.zeros((reps * o, reps * i), dtype=m.dtype)
    for r in range(reps):
        bd[r * o:(r + 1) * o, r * i:(r + 1) * i] = m
    return bd


def _vmem_budgets():
    """(per-step block budget, vmem_limit_bytes) derived from the chip's VMEM capacity."""
    cap = 64 * 2**20  # conservative fallback (v7x-sized)
    try:
        cap = int(pltpu.get_tpu_info().vmem_capacity_bytes)
    except Exception:
        pass
    budget = int(min(cap // 4, 24 * 2**20))     # ~24 MiB on v5e/v6e, ~16 MiB on v7x
    vmem_limit = int(min(cap // 2, 64 * 2**20))  # raise scoped VMEM, leave headroom
    return budget, vmem_limit


def _pick_channel_block(N, C, H, W, Ho, Wo, x_itemsize, w_itemsize, budget_bytes,
                        max_cb=8):
    """Largest divisor of C whose double-buffered blocks fit the VMEM budget.

    max_cb bounds the block-diagonal H matrix (its MACs & bytes grow ~cb^2); deformation
    fields have C in {2,3,4}, so this cap is never the limiter in practice.
    """
    best = 1
    for cb in range(1, min(C, max_cb) + 1):
        if C % cb:
            continue
        x_blk = cb * H * W * x_itemsize
        o_blk = cb * Ho * Wo * x_itemsize
        mh_blk = (cb * Ho) * (cb * H) * w_itemsize
        mwt_blk = W * Wo * w_itemsize
        inter = cb * max(H * Wo, Ho * W) * 4            # f32 matmul intermediate
        total = 2 * (x_blk + o_blk + mh_blk + mwt_blk) + 2 * inter
        if total <= budget_bytes:
            best = cb
    # keep >= 2 "parallel" grid points when possible (v7x has 2 TensorCores)
    while best > 1 and N * (C // best) < 2:
        best -= 1
        while best > 1 and C % best != 0:
            best -= 1
    return best


# ---------------------------------------------------------------------------
# Pallas kernel: per-(image, channel-block) separable bilinear resample
# ---------------------------------------------------------------------------
def _rescale_kernel(x_ref, mh_ref, mwt_ref, o_ref, *, w_first, cdtype):
    # x_ref:   (1, cb, Hin, Win)     input block (NCHW, W on lanes / H on sublanes)
    # mh_ref:  (cb*Hout, cb*Hin)     block-diagonal H-interp matrix (channels folded)
    # mwt_ref: (Win, Wout)           W-interp matrix, transposed
    # o_ref:   (1, cb, Hout, Wout)
    cb, hin, win = x_ref.shape[1], x_ref.shape[2], x_ref.shape[3]
    hout, wout = o_ref.shape[2], o_ref.shape[3]
    cdtype = np.dtype(cdtype)

    x2 = x_ref[0].reshape(cb * hin, win)            # collapse leading dims -> big matmul M
    if x2.dtype != cdtype:
        x2 = x2.astype(cdtype)
    mh = mh_ref[...]
    mwt = mwt_ref[...]

    if w_first:
        t = jnp.dot(x2, mwt, preferred_element_type=jnp.float32)    # (cb*Hin, Wout)   MXU
        if cdtype != np.dtype(np.float32):
            t = t.astype(cdtype)
        o2 = jnp.dot(mh, t, preferred_element_type=jnp.float32)     # (cb*Hout, Wout)  MXU
    else:
        t = jnp.dot(mh, x2, preferred_element_type=jnp.float32)     # (cb*Hout, Win)   MXU
        if cdtype != np.dtype(np.float32):
            t = t.astype(cdtype)
        o2 = jnp.dot(t, mwt, preferred_element_type=jnp.float32)    # (cb*Hout, Wout)  MXU

    # one store of the whole block (no per-channel partial stores)
    o_ref[0] = o2.reshape(cb, hout, wout).astype(o_ref.dtype)


# ---------------------------------------------------------------------------
# Wrapper: RescaleTransform.forward
# ---------------------------------------------------------------------------
def rescale_transform_forward(x_nchw, factor: float, mode: str = "bilinear"):
    """x_nchw: (N, C, H, W). Returns F.interpolate(x, scale_factor=factor,
    mode='bilinear', align_corners=True)."""
    if mode != "bilinear":
        # TODO(synk): only mode='bilinear' (the module default, 4-D input) is implemented.
        raise NotImplementedError("only mode='bilinear' is supported")

    N, C, H, W = x_nchw.shape
    Ho, Wo = _out_size(H, factor), _out_size(W, factor)
    if Ho <= 0 or Wo <= 0:
        raise ValueError(f"scale_factor={factor} produces an empty output for input {H}x{W}")

    # bf16 inputs stay on the full-rate bf16 MXU path; everything else computes in f32.
    cdtype = jnp.bfloat16 if x_nchw.dtype == jnp.dtype(jnp.bfloat16) else jnp.float32
    w_itemsize = jnp.dtype(cdtype).itemsize
    x_itemsize = jnp.dtype(x_nchw.dtype).itemsize

    budget, vmem_limit = _vmem_budgets()
    cb = _pick_channel_block(N, C, H, W, Ho, Wo, x_itemsize, w_itemsize, budget)

    mh_bd = jnp.asarray(_block_diag(_interp_matrix(Ho, H), cb)).astype(cdtype)  # (cb*Ho, cb*H)
    mwt = jnp.asarray(_interp_matrix(Wo, W).T).astype(cdtype)                   # (W, Wo)

    # Pass order: whichever does fewer MACs (block-diag H-pass cost included).
    macs_w_first = cb * H * W * Wo + (cb * Ho) * (cb * H) * Wo
    macs_h_first = (cb * Ho) * (cb * H) * W + cb * Ho * W * Wo
    w_first = macs_w_first <= macs_h_first

    steps = N * (C // cb)
    out_bytes = N * C * Ho * Wo * x_itemsize
    cost = pl.CostEstimate(
        flops=2 * min(macs_w_first, macs_h_first) * steps,
        transcendentals=0,
        bytes_accessed=(x_nchw.size * x_itemsize + out_bytes
                        + mh_bd.size * w_itemsize + mwt.size * w_itemsize),
    )

    kernel = partial(_rescale_kernel, w_first=w_first, cdtype=jnp.dtype(cdtype))

    return pl.pallas_call(
        kernel,
        out_shape=jax.ShapeDtypeStruct((N, C, Ho, Wo), x_nchw.dtype),
        grid_spec=pltpu.PrefetchScalarGridSpec(
            num_scalar_prefetch=0,
            grid=(N, C // cb),
            in_specs=[
                pl.BlockSpec((1, cb, H, W), lambda n, c: (n, c, 0, 0)),
                pl.BlockSpec((cb * Ho, cb * H), lambda n, c: (0, 0)),
                pl.BlockSpec((W, Wo), lambda n, c: (0, 0)),
            ],
            out_specs=pl.BlockSpec((1, cb, Ho, Wo), lambda n, c: (n, c, 0, 0)),
        ),
        compiler_params=pltpu.CompilerParams(
            dimension_semantics=("parallel", "parallel"),
            vmem_limit_bytes=vmem_limit),
        cost_estimate=cost,
    )(x_nchw, mh_bd, mwt)


# ---------------------------------------------------------------------------
# Pure-JAX reference (independent gather formulation of bilinear, align_corners=True)
# ---------------------------------------------------------------------------
def rescale_reference(x, factor):
    N, C, H, W = x.shape
    Ho, Wo = _out_size(H, factor), _out_size(W, factor)

    def src_coords(out_size, in_size):
        if out_size == 1 or in_size == 1:
            return np.zeros((out_size,), np.float64)
        return np.arange(out_size) * ((in_size - 1) / (out_size - 1))

    sy = src_coords(Ho, H)
    sx = src_coords(Wo, W)
    y0 = np.minimum(np.floor(sy).astype(np.int32), H - 1)
    y1 = np.minimum(y0 + 1, H - 1)
    x0 = np.minimum(np.floor(sx).astype(np.int32), W - 1)
    x1 = np.minimum(x0 + 1, W - 1)
    wy = jnp.asarray((sy - y0).astype(np.float32))[None, None, :, None]
    wx = jnp.asarray((sx - x0).astype(np.float32))[None, None, None, :]

    a = x[:, :, y0][:, :, :, x0]
    b = x[:, :, y0][:, :, :, x1]
    c = x[:, :, y1][:, :, :, x0]
    d = x[:, :, y1][:, :, :, x1]
    top = a * (1 - wx) + b * wx
    bot = c * (1 - wx) + d * wx
    return top * (1 - wy) + bot * wy


if __name__ == "__main__":
    key = jax.random.PRNGKey(0)
    N, C, H, W = 2, 4, 16, 16
    x = jax.random.normal(key, (N, C, H, W), dtype=jnp.float32)

    # factor >= 1 and factor < 1 branches of the module (same bilinear / align_corners=True).
    for factor in (2.0, 0.5):
        out = jax.block_until_ready(rescale_transform_forward(x, factor))
        ref = rescale_reference(x, factor)
        Ho, Wo = _out_size(H, factor), _out_size(W, factor)
        assert out.shape == (N, C, Ho, Wo), (out.shape, (N, C, Ho, Wo))
        err = float(jnp.max(jnp.abs(out - ref)))
        assert err < 1e-4, err

    # bf16 fast path (bf16 x bf16 -> f32 on the MXU); looser tolerance for bf16 weights.
    xb = x.astype(jnp.bfloat16)
    outb = jax.block_until_ready(rescale_transform_forward(xb, 2.0))
    refb = rescale_reference(xb.astype(jnp.float32), 2.0)
    errb = float(jnp.max(jnp.abs(outb.astype(jnp.float32) - refb)))
    assert errb < 0.1, errb

    print("KERNEL_OK")
</pallas_src>

<mosaic_0001>
module attributes {stable_mosaic.version = 11 : i64} {
  func.func @_rescale_kernel(%arg0: i32, %arg1: i32, %arg2: memref<1x4x16x16xf32, #tpu.memory_space<vmem>>, %arg3: memref<128x64xf32, #tpu.memory_space<vmem>>, %arg4: memref<16x32xf32, #tpu.memory_space<vmem>>, %arg5: memref<1x4x32x32xf32, #tpu.memory_space<vmem>>) attributes {dimension_semantics = [#tpu.dimension_semantics<parallel>, #tpu.dimension_semantics<parallel>], iteration_bounds = array<i64: 2, 1>, scalar_prefetch = 0 : i64, scratch_operands = 0 : i64, tpu.core_type = #tpu.core_type<tc>, window_params = [{transform_indices = @transform_0, window_bounds = array<i64: 1, 4, 16, 16>}, {pipeline_mode = #tpu.pipeline_mode<synchronous>, transform_indices = @transform_1, window_bounds = array<i64: 128, 64>}, {pipeline_mode = #tpu.pipeline_mode<synchronous>, transform_indices = @transform_2, window_bounds = array<i64: 16, 32>}, {transform_indices = @transform_3, window_bounds = array<i64: 1, 4, 32, 32>}]} {
    %c0 = arith.constant 0 : index
    %c0_0 = arith.constant 0 : index
    %c0_1 = arith.constant 0 : index
    %c0_2 = arith.constant 0 : index
    %0 = vector.load %arg2[%c0, %c0_0, %c0_1, %c0_2] : memref<1x4x16x16xf32, #tpu.memory_space<vmem>>, vector<1x4x16x16xf32>
    %1 = vector.shape_cast %0 : vector<1x4x16x16xf32> to vector<4x16x16xf32>
    %2 = vector.shape_cast %1 : vector<4x16x16xf32> to vector<64x16xf32>
    %c0_3 = arith.constant 0 : index
    %c0_4 = arith.constant 0 : index
    %3 = vector.load %arg3[%c0_3, %c0_4] : memref<128x64xf32, #tpu.memory_space<vmem>>, vector<128x64xf32>
    %c0_5 = arith.constant 0 : index
    %c0_6 = arith.constant 0 : index
    %4 = vector.load %arg4[%c0_5, %c0_6] : memref<16x32xf32, #tpu.memory_space<vmem>>, vector<16x32xf32>
    %cst = arith.constant dense<0.000000e+00> : vector<128x16xf32>
    %5 = tpu.matmul %3, %2, %cst {dimension_numbers = #tpu.dot_dimension_numbers<[1], [0], [0], [1], [0, 0, 1, 1], [], []>} : vector<128x64xf32>, vector<64x16xf32>, vector<128x16xf32> -> vector<128x16xf32>
    %cst_7 = arith.constant dense<0.000000e+00> : vector<128x32xf32>
    %6 = tpu.matmul %5, %4, %cst_7 {dimension_numbers = #tpu.dot_dimension_numbers<[1], [0], [0], [1], [0, 0, 1, 1], [], []>} : vector<128x16xf32>, vector<16x32xf32>, vector<128x32xf32> -> vector<128x32xf32>
    %7 = vector.shape_cast %6 : vector<128x32xf32> to vector<4x32x32xf32>
    %c0_8 = arith.constant 0 : index
    %c0_9 = arith.constant 0 : index
    %c0_10 = arith.constant 0 : index
    %c0_11 = arith.constant 0 : index
    %8 = vector.load %arg5[%c0_8, %c0_9, %c0_10, %c0_11] : memref<1x4x32x32xf32, #tpu.memory_space<vmem>>, vector<1x4x32x32xf32>
    %9 = vector.shape_cast %8 : vector<1x4x32x32xf32> to vector<4x32x32xf32>
    %10 = vector.shape_cast %7 : vector<4x32x32xf32> to vector<1x4x32x32xf32>
    tpu.vector_store %arg5[%c0_8, %c0_9, %c0_10, %c0_11], %10 {strides = array<i32>} : memref<1x4x32x32xf32, #tpu.memory_space<vmem>>, vector<1x4x32x32xf32>,
    return
  }
  func.func @transform_0(%arg0: i32, %arg1: i32) -> (i32, i32, i32, i32) {
    %c0_i32 = arith.constant 0 : i32
    %c0_i32_0 = arith.constant 0 : i32
    %c0_i32_1 = arith.constant 0 : i32
    return %arg0, %arg1, %c0_i32, %c0_i32_0 : i32, i32, i32, i32
  }
  func.func @transform_1(%arg0: i32, %arg1: i32) -> (i32, i32) {
    %c0_i32 = arith.constant 0 : i32
    %c0_i32_0 = arith.constant 0 : i32
    %c0_i32_1 = arith.constant 0 : i32
    return %c0_i32, %c0_i32_0 : i32, i32
  }
  func.func @transform_2(%arg0: i32, %arg1: i32) -> (i32, i32) {
    %c0_i32 = arith.constant 0 : i32
    %c0_i32_0 = arith.constant 0 : i32
    %c0_i32_1 = arith.constant 0 : i32
    return %c0_i32, %c0_i32_0 : i32, i32
  }
  func.func @transform_3(%arg0: i32, %arg1: i32) -> (i32, i32, i32, i32) {
    %c0_i32 = arith.constant 0 : i32
    %c0_i32_0 = arith.constant 0 : i32
    %c0_i32_1 = arith.constant 0 : i32
    return %arg0, %arg1, %c0_i32, %c0_i32_0 : i32, i32, i32, i32
  }
}

</mosaic_0001>

<llo_original>
// kernel: tpu_custom_call.1
$region0: #{tpu_custom_call.1}
  #allocation0 [shape = 'u32[]', space=smem, size = 0x4, offset = 0x4, fixed_abs, tag = 'smem constant byte address 0x4 - core index']
  #allocation1 [shape = 'u32[72,128]{1,0:T(1,128)}', space=vmem, size = 0x9000, scoped, tag = 'internal scratch']
  %s0 = inlined_call_operand.vmem [shape: f32[2,4,16,16], index: 0, kind: input, shape index: {}]
  %s1 = inlined_call_operand.vmem [shape: f32[128,64], index: 1, kind: input, shape index: {}]
  %s2 = inlined_call_operand.vmem [shape: f32[16,32], index: 2, kind: input, shape index: {}]
  %s3 = inlined_call_operand.hbm [shape: f32[2,4,32,32], index: 3, kind: output, shape index: {}]
  %s4 = sld [smem:[#allocation0]]
  $region45: #{tpu_custom_call.1} parent=0
    _
  %s6 = ssub.s32 1, %s4
  %s7 = scalar_select 0, %s6, %s4
  $region1: #{tpu_custom_call.1} parent=0
    #allocation2 [shape = 'u8[131072]{0}', space=vmem, size = 0x20000, scoped, tag = 'output window, operand 0']
    #allocation3 [shape = 's32[2]{0}', space=sflag, size = 0x8, scoped, tag = 'scoped memory for tpu_custom_call.1']
    %8 = vsyncpa [#allocation3], 0
    %s9 = scalar_lea.sflag [#allocation3], 1
    %10 = vsyncpa %s9, 0
    loop: start=0, step=1, limit=4
    $region2: #{tpu_custom_call.1} parent=1 // loop_pre_header
      _
    $region3: #{tpu_custom_call.1} parent=1 // loop_header
      %s12 = sphi 0, %s16
      %p13 = scmp.ge.s32.totalorder %s12, 4
      %s19 = sphi 0, %s31
      %s20 = sphi 0, %s27
      %s21 = sphi 0, %s19
      %s22 = sphi 0, %s20
      %s23 = sphi 0, %s21
      %s24 = sphi 0, %s22
      %s36 = sphi 0, %s38
      %s39 = sphi 0, %s36
      %s40 = sphi 0, %s39
      %s56 = sphi 0, %s40
      %s60 = sphi 0, %s60
      %s62 = sphi 0, %s60
      %s63 = sphi 0, %s62
      %s77 = sphi 0, %s63
      %s81 = sphi 0, %s81
      %s83 = sphi 0, %s81
      %s84 = sphi 0, %s83
      %s98 = sphi 0, %s84
      %s106 = sphi 0, %s108
      %s109 = sphi 0, %s106
      %s110 = sphi 0, %s109
      %s126 = sphi 0, %s110
    $region4: #{tpu_custom_call.1} parent=1 // loop_header_branch
      %15 = sbr.rel (%p13) target = $region8
    $region5: #{tpu_custom_call.1} parent=1 // loop_body
      %s17 = ssub.s32 %s12, 1
      %s18 = ssub.s32 %s12, 2
      %s25 = sadd.s32 1, %s20
      %p26 = scmp.ge.s32.totalorder %s25, 1
      %s27 = scalar_select %p26, 0, %s25
      %s28 = sadd.s32 1, %s19
      %s29 = scalar_select %p26, %s28, %s19
      %p30 = scmp.ge.s32.totalorder %s29, 2
      %s31 = scalar_select %p30, 0, %s29
      %s32 = ssub.s32 %s19, %s31
      %s33 = ssub.s32 %s20, %s27
      %s34 = sor.u32 %s32, %s33
      %p35 = scmp.eq.s32.totalorder %s34, 0
      %s37 = sadd.s32 %s36, 1
      %s38 = scalar_select %p35, %s36, %s37
      %p41 = pneg %p35
      %p42 = scmp.eq.s32.totalorder %s12, 1
      %p43 = por %p41, %p42
      %p44 = scmp.ne.s32.totalorder %s36, %s39
      %p45 = scmp.eq.s32.totalorder %s12, 0
      %p46 = por %p44, %p45
      %p47 = scmp.ne.s32.totalorder %s36, %s39
      %p48 = scmp.eq.s32.totalorder %s17, 1
      %p49 = por %p47, %p48
      %p50 = scmp.ne.s32.totalorder %s39, %s40
      %p51 = scmp.eq.s32.totalorder %s17, 0
      %p52 = por %p50, %p51
      %p53 = scmp.ne.s32.totalorder %s39, %s40
      %p54 = scmp.eq.s32.totalorder %s18, 1
      %p55 = por %p53, %p54
      %p57 = scmp.ne.s32.totalorder %s40, %s56
      %p58 = scmp.eq.s32.totalorder %s18, 0
      %p59 = por %p57, %p58
      %s61 = sadd.s32 %s60, 1
      %p64 = scmp.eq.s32.totalorder %s12, 1
      %p65 = scmp.ne.s32.totalorder %s60, %s62
      %p66 = scmp.eq.s32.totalorder %s12, 0
      %p67 = por %p65, %p66
      %p68 = scmp.ne.s32.totalorder %s60, %s62
      %p69 = scmp.eq.s32.totalorder %s17, 1
      %p70 = por %p68, %p69
      %p71 = scmp.ne.s32.totalorder %s62, %s63
      %p72 = scmp.eq.s32.totalorder %s17, 0
      %p73 = por %p71, %p72
      %p74 = scmp.ne.s32.totalorder %s62, %s63
      %p75 = scmp.eq.s32.totalorder %s18, 1
      %p76 = por %p74, %p75
      %p78 = scmp.ne.s32.totalorder %s63, %s77
      %p79 = scmp.eq.s32.totalorder %s18, 0
      %p80 = por %p78, %p79
      %s82 = sadd.s32 %s81, 1
      %p85 = scmp.eq.s32.totalorder %s12, 1
      %p86 = scmp.ne.s32.totalorder %s81, %s83
      %p87 = scmp.eq.s32.totalorder %s12, 0
      %p88 = por %p86, %p87
      %p89 = scmp.ne.s32.totalorder %s81, %s83
      %p90 = scmp.eq.s32.totalorder %s17, 1
      %p91 = por %p89, %p90
      %p92 = scmp.ne.s32.totalorder %s83, %s84
      %p93 = scmp.eq.s32.totalorder %s17, 0
      %p94 = por %p92, %p93
      %p95 = scmp.ne.s32.totalorder %s83, %s84
      %p96 = scmp.eq.s32.totalorder %s18, 1
      %p97 = por %p95, %p96
      %p99 = scmp.ne.s32.totalorder %s84, %s98
      %p100 = scmp.eq.s32.totalorder %s18, 0
      %p101 = por %p99, %p100
      %s102 = ssub.s32 %s19, %s31
      %s103 = ssub.s32 %s20, %s27
      %s104 = sor.u32 %s102, %s103
      %p105 = scmp.eq.s32.totalorder %s104, 0
      %s107 = sadd.s32 %s106, 1
      %s108 = scalar_select %p105, %s106, %s107
      %p111 = pneg %p105
      %p112 = scmp.eq.s32.totalorder %s12, 1
      %p113 = por %p111, %p112
      %p114 = scmp.ne.s32.totalorder %s106, %s109
      %p115 = scmp.eq.s32.totalorder %s12, 0
      %p116 = por %p114, %p115
      %p117 = scmp.ne.s32.totalorder %s106, %s109
      %p118 = scmp.eq.s32.totalorder %s17, 1
      %p119 = por %p117, %p118
      %p120 = scmp.ne.s32.totalorder %s109, %s110
      %p121 = scmp.eq.s32.totalorder %s17, 0
      %p122 = por %p120, %p121
      %p123 = scmp.ne.s32.totalorder %s109, %s110
      %p124 = scmp.eq.s32.totalorder %s18, 1
      %p125 = por %p123, %p124
      %p127 = scmp.ne.s32.totalorder %s110, %s126
      %p128 = scmp.eq.s32.totalorder %s18, 0
      %p129 = por %p127, %p128
      %p130 = scmp.le.s32.totalorder 1, %s12
      %p131 = scmp.lt.s32.totalorder %s12, 3
      %p132 = pnand %p130, %p131
      %p133 = pneg %p132
      // Predicated region
      $region9: #{tpu_custom_call.1} parent=5 // pred_check
        _
      $region10: #{tpu_custom_call.1} parent=5 // pred_check_branch
        %135 = sbr.rel (%p132) target = $region12
      $region11: #{tpu_custom_call.1} parent=5 // pred_region
        %s136 = ssub.s32 %s12, 1
        // Predicated region
        $region13: #{tpu_custom_call.1} parent=11 // pred_check
          %p137 = pneg %p73
        $region14: #{tpu_custom_call.1} parent=11 // pred_check_branch
          %139 = sbr.rel (%p137) target = $region16
        $region15: #{tpu_custom_call.1} parent=11 // pred_region
          _
        $region16: #{tpu_custom_call.1} parent=11 // pred_fallthru
          _
        // Predicated region
        $region17: #{tpu_custom_call.1} parent=11 // pred_check
          %p140 = pneg %p94
        $region18: #{tpu_custom_call.1} parent=11 // pred_check_branch
          %142 = sbr.rel (%p140) target = $region20
        $region19: #{tpu_custom_call.1} parent=11 // pred_region
          _
        $region20: #{tpu_custom_call.1} parent=11 // pred_fallthru
          _
      $region12: #{tpu_custom_call.1} parent=5 // pred_fallthru
        _
      %p143 = scmp.lt.s32.totalorder %s12, 2
      // Predicated region
      $region21: #{tpu_custom_call.1} parent=5 // pred_check
        %p144 = pneg %p143
      $region22: #{tpu_custom_call.1} parent=5 // pred_check_branch
        %146 = sbr.rel (%p144) target = $region24
      $region23: #{tpu_custom_call.1} parent=5 // pred_region
        // Predicated region
        $region25: #{tpu_custom_call.1} parent=23 // pred_check
          %p147 = pneg %p46
        $region26: #{tpu_custom_call.1} parent=23 // pred_check_branch
          %149 = sbr.rel (%p147) target = $region28
        $region27: #{tpu_custom_call.1} parent=23 // pred_region
          %s150 = smul.u32 4, %s20
          %p151 = scmp.lt.s32.totalorder %s19, 1
          %s152 = scalar_select %p151, %s19, 1
          %p153 = scmp.lt.s32.totalorder %s150, 3
          %s154 = scalar_select %p153, %s150, 3
          %s155 = smul.addr %s154, 2
          %s156 = smul.addr %s152, 8
          %s157 = sadd.s32 %s155, %s156
          %s158 = smul.addr %s157, 8
          %s159 = scalar_lea.vmem %s0, %s158
          %s160 = smul.u32 4, %s20
        $region28: #{tpu_custom_call.1} parent=23 // pred_fallthru
          _
      $region24: #{tpu_custom_call.1} parent=5 // pred_fallthru
        _
      %p161 = scmp.le.s32.totalorder 1, %s12
      %p162 = scmp.lt.s32.totalorder %s12, 3
      %p163 = pnand %p161, %p162
      %p164 = pneg %p163
      // Predicated region
      $region29: #{tpu_custom_call.1} parent=5 // pred_check
        _
      $region30: #{tpu_custom_call.1} parent=5 // pred_check_branch
        %166 = sbr.rel (%p163) target = $region32
      $region31: #{tpu_custom_call.1} parent=5 // pred_region
        %s167 = ssub.s32 %s12, 1
        %s168 = smul.u32 4, %s22
        %p169 = scmp.lt.s32.totalorder %s21, 1
        %s170 = scalar_select %p169, %s21, 1
        %p171 = scmp.lt.s32.totalorder %s168, 3
        %s172 = scalar_select %p171, %s168, 3
        %s173 = smul.addr %s172, 2
        %s174 = smul.addr %s170, 8
        %s175 = sadd.s32 %s173, %s174
        %s176 = smul.addr %s175, 8
        %s177 = scalar_lea.vmem %s0, %s176
        %p178 = pneg %p52
        %p179 = pneg %p49
        %p180 = pneg %p73
        %p181 = pneg %p70
        %p182 = pneg %p94
        %p183 = pneg %p91
        %p184 = pneg %p122
        %p185 = pneg %p119
        %s186 = sand.u32 %s109, 1
        %s187 = scalar_lea.sflag [#allocation3], %s186
        %s188 = sand.u32 %s109, 1
        %s189 = smul.addr %s188, 128
        %s190 = scalar_lea.vmem [#allocation2], %s189
        %s191 = smul.u32 4, %s22
        %p192 = scmp.lt.s32.totalorder %s21, 1
        %s193 = scalar_select %p192, %s21, 1
        %p194 = scmp.lt.s32.totalorder %s191, 3
        %s195 = scalar_select %p194, %s191, 3
        %s196 = smul.addr %s195, 2
        %s197 = smul.addr %s193, 8
        %s198 = sadd.s32 %s196, %s197
        %s199 = smul.addr %s198, 8
        %s200 = scalar_lea.vmem %s0, %s199
        %s201 = smul.u32 4, %s22
        %s202 = smul.u32 4, %s22
        %v203 = vld [vmem:[%s200] sm:$0xff]
        %v204 = vld [vmem:[%s200 + $0x8] sm:$0xff]
        %v205 = vld [vmem:[%s200 + $0x10] sm:$0xff]
        %v206 = vld [vmem:[%s200 + $0x18] sm:$0xff]
        %v207 = vld [vmem:[%s200 + $0x20] sm:$0xff]
        %v208 = vld [vmem:[%s200 + $0x28] sm:$0xff]
        %v209 = vld [vmem:[%s200 + $0x30] sm:$0xff]
        %v210 = vld [vmem:[%s200 + $0x38] sm:$0xff]
        %v211 = vld [vmem:[%s1] sm:$0xff]
        %v212 = vld [vmem:[%s1 + $0x8] sm:$0xff]
        %v213 = vld [vmem:[%s1 + $0x10] sm:$0xff]
        %v214 = vld [vmem:[%s1 + $0x18] sm:$0xff]
        %v215 = vld [vmem:[%s1 + $0x20] sm:$0xff]
        %v216 = vld [vmem:[%s1 + $0x28] sm:$0xff]
        %v217 = vld [vmem:[%s1 + $0x30] sm:$0xff]
        %v218 = vld [vmem:[%s1 + $0x38] sm:$0xff]
        %v219 = vld [vmem:[%s1 + $0x40] sm:$0xff]
        %v220 = vld [vmem:[%s1 + $0x48] sm:$0xff]
        %v221 = vld [vmem:[%s1 + $0x50] sm:$0xff]
        %v222 = vld [vmem:[%s1 + $0x58] sm:$0xff]
        %v223 = vld [vmem:[%s1 + $0x60] sm:$0xff]
        %v224 = vld [vmem:[%s1 + $0x68] sm:$0xff]
        %v225 = vld [vmem:[%s1 + $0x70] sm:$0xff]
        %v226 = vld [vmem:[%s1 + $0x78] sm:$0xff]
        %v227 = vld [vmem:[%s2] sm:$0xff]
        %v228 = vld [vmem:[%s2 + $0x8] sm:$0xff]
        %vm229 = vcmask 523264
        %v231 = vsel %vm229, %v211, 0
        %v234 = vsel %vm229, %v212, 0
        %v237 = vsel %vm229, %v213, 0
        %v240 = vsel %vm229, %v214, 0
        %v243 = vsel %vm229, %v215, 0
        %v246 = vsel %vm229, %v216, 0
        %v249 = vsel %vm229, %v217, 0
        %v252 = vsel %vm229, %v218, 0
        %v255 = vsel %vm229, %v219, 0
        %v258 = vsel %vm229, %v220, 0
        %v261 = vsel %vm229, %v221, 0
        %v264 = vsel %vm229, %v222, 0
        %v267 = vsel %vm229, %v223, 0
        %v270 = vsel %vm229, %v224, 0
        %v273 = vsel %vm229, %v225, 0
        %v276 = vsel %vm229, %v226, 0
        %278 = vmatpush.msra.mxu0 0.0
        %279 = vmatpush.msra.mxu0 0.0
        %280 = vmatpush.msra.mxu0 0.0
        %281 = vmatpush.msra.mxu0 0.0
        %282 = vmatpush.msra.mxu0 0.0
        %283 = vmatpush.msra.mxu0 0.0
        %284 = vmatpush.msra.mxu0 0.0
        %285 = vmatpush.msra.mxu0 0.0
        %286 = vmatpush.msra.mxu0 %v210
        %287 = vmatpush.msra.mxu0 %v209
        %288 = vmatpush.msra.mxu0 %v208
        %289 = vmatpush.msra.mxu0 %v207
        %290 = vmatpush.msra.mxu0 %v206
        %291 = vmatpush.msra.mxu0 %v205
        %292 = vmatpush.msra.mxu0 %v204
        %293 = vmatpush.msra.mxu0 %v203
        %294 = vmatmul.f32.gmra.mxu0 %v231
        %v295 = vpop.f32.mrf.mxu0
        %v296 = vadd.f32 0.0, %v295
        %297 = vmatmul.f32.gmra.mxu0 %v234
        %v298 = vpop.f32.mrf.mxu0
        %v299 = vadd.f32 0.0, %v298
        %300 = vmatmul.f32.gmra.mxu0 %v237
        %v301 = vpop.f32.mrf.mxu0
        %v302 = vadd.f32 0.0, %v301
        %303 = vmatmul.f32.gmra.mxu0 %v240
        %v304 = vpop.f32.mrf.mxu0
        %v305 = vadd.f32 0.0, %v304
        %306 = vmatmul.f32.gmra.mxu0 %v243
        %v307 = vpop.f32.mrf.mxu0
        %v308 = vadd.f32 0.0, %v307
        %309 = vmatmul.f32.gmra.mxu0 %v246
        %v310 = vpop.f32.mrf.mxu0
        %v311 = vadd.f32 0.0, %v310
        %312 = vmatmul.f32.gmra.mxu0 %v249
        %v313 = vpop.f32.mrf.mxu0
        %v314 = vadd.f32 0.0, %v313
        %315 = vmatmul.f32.gmra.mxu0 %v252
        %v316 = vpop.f32.mrf.mxu0
        %v317 = vadd.f32 0.0, %v316
        %318 = vmatmul.f32.gmra.mxu0 %v255
        %v319 = vpop.f32.mrf.mxu0
        %v320 = vadd.f32 0.0, %v319
        %321 = vmatmul.f32.gmra.mxu0 %v258
        %v322 = vpop.f32.mrf.mxu0
        %v323 = vadd.f32 0.0, %v322
        %324 = vmatmul.f32.gmra.mxu0 %v261
        %v325 = vpop.f32.mrf.mxu0
        %v326 = vadd.f32 0.0, %v325
        %327 = vmatmul.f32.gmra.mxu0 %v264
        %v328 = vpop.f32.mrf.mxu0
        %v329 = vadd.f32 0.0, %v328
        %330 = vmatmul.f32.gmra.mxu0 %v267
        %v331 = vpop.f32.mrf.mxu0
        %v332 = vadd.f32 0.0, %v331
        %333 = vmatmul.f32.gmra.mxu0 %v270
        %v334 = vpop.f32.mrf.mxu0
        %v335 = vadd.f32 0.0, %v334
        %336 = vmatmul.f32.gmra.mxu0 %v273
        %v337 = vpop.f32.mrf.mxu0
        %v338 = vadd.f32 0.0, %v337
        %339 = vmatmul.f32.gmra.mxu0 %v276
        %v340 = vpop.f32.mrf.mxu0
        %v341 = vadd.f32 0.0, %v340
        %342 = vdwg.mxu0
        %vm343 = vcmask 130048
        %v345 = vsel %vm343, %v296, 0
        %v348 = vsel %vm343, %v299, 0
        %v351 = vsel %vm343, %v302, 0
        %v354 = vsel %vm343, %v305, 0
        %v357 = vsel %vm343, %v308, 0
        %v360 = vsel %vm343, %v311, 0
        %v363 = vsel %vm343, %v314, 0
        %v366 = vsel %vm343, %v317, 0
        %v369 = vsel %vm343, %v320, 0
        %v372 = vsel %vm343, %v323, 0
        %v375 = vsel %vm343, %v326, 0
        %v378 = vsel %vm343, %v329, 0
        %v381 = vsel %vm343, %v332, 0
        %v384 = vsel %vm343, %v335, 0
        %v387 = vsel %vm343, %v338, 0
        %v390 = vsel %vm343, %v341, 0
        %392 = vmatpush.msra.mxu0 0.0
        %393 = vmatpush.msra.mxu0 0.0
        %394 = vmatpush.msra.mxu0 0.0
        %395 = vmatpush.msra.mxu0 0.0
        %396 = vmatpush.msra.mxu0 0.0
        %397 = vmatpush.msra.mxu0 0.0
        %398 = vmatpush.msra.mxu0 0.0
        %399 = vmatpush.msra.mxu0 0.0
        %400 = vmatpush.msra.mxu0 0.0
        %401 = vmatpush.msra.mxu0 0.0
        %402 = vmatpush.msra.mxu0 0.0
        %403 = vmatpush.msra.mxu0 0.0
        %404 = vmatpush.msra.mxu0 0.0
        %405 = vmatpush.msra.mxu0 0.0
        %406 = vmatpush.msra.mxu0 %v228
        %407 = vmatpush.msra.mxu0 %v227
        %408 = vmatmul.f32.gmra.mxu0 %v345
        %v409 = vpop.f32.mrf.mxu0
        %v410 = vadd.f32 0.0, %v409
        %411 = vmatmul.f32.gmra.mxu0 %v348
        %v412 = vpop.f32.mrf.mxu0
        %v413 = vadd.f32 0.0, %v412
        %414 = vmatmul.f32.gmra.mxu0 %v351
        %v415 = vpop.f32.mrf.mxu0
        %v416 = vadd.f32 0.0, %v415
        %417 = vmatmul.f32.gmra.mxu0 %v354
        %v418 = vpop.f32.mrf.mxu0
        %v419 = vadd.f32 0.0, %v418
        %420 = vmatmul.f32.gmra.mxu0 %v357
        %v421 = vpop.f32.mrf.mxu0
        %v422 = vadd.f32 0.0, %v421
        %423 = vmatmul.f32.gmra.mxu0 %v360
        %v424 = vpop.f32.mrf.mxu0
        %v425 = vadd.f32 0.0, %v424
        %426 = vmatmul.f32.gmra.mxu0 %v363
        %v427 = vpop.f32.mrf.mxu0
        %v428 = vadd.f32 0.0, %v427
        %429 = vmatmul.f32.gmra.mxu0 %v366
        %v430 = vpop.f32.mrf.mxu0
        %v431 = vadd.f32 0.0, %v430
        %432 = vmatmul.f32.gmra.mxu0 %v369
        %v433 = vpop.f32.mrf.mxu0
        %v434 = vadd.f32 0.0, %v433
        %435 = vmatmul.f32.gmra.mxu0 %v372
        %v436 = vpop.f32.mrf.mxu0
        %v437 = vadd.f32 0.0, %v436
        %438 = vmatmul.f32.gmra.mxu0 %v375
        %v439 = vpop.f32.mrf.mxu0
        %v440 = vadd.f32 0.0, %v439
        %441 = vmatmul.f32.gmra.mxu0 %v378
        %v442 = vpop.f32.mrf.mxu0
        %v443 = vadd.f32 0.0, %v442
        %444 = vmatmul.f32.gmra.mxu0 %v381
        %v445 = vpop.f32.mrf.mxu0
        %v446 = vadd.f32 0.0, %v445
        %447 = vmatmul.f32.gmra.mxu0 %v384
        %v448 = vpop.f32.mrf.mxu0
        %v449 = vadd.f32 0.0, %v448
        %450 = vmatmul.f32.gmra.mxu0 %v387
        %v451 = vpop.f32.mrf.mxu0
        %v452 = vadd.f32 0.0, %v451
        %453 = vmatmul.f32.gmra.mxu0 %v390
        %v454 = vpop.f32.mrf.mxu0
        %v455 = vadd.f32 0.0, %v454
        %456 = vdwg.mxu0
        %vm457 = vcmask 261120
        %458 = vst.msk [vmem:[%s190] sm:$0xff] %vm457, %v410
        %459 = vst.msk [vmem:[%s190 + $0x8] sm:$0xff] %vm457, %v413
        %460 = vst.msk [vmem:[%s190 + $0x10] sm:$0xff] %vm457, %v416
        %461 = vst.msk [vmem:[%s190 + $0x18] sm:$0xff] %vm457, %v419
        %462 = vst.msk [vmem:[%s190 + $0x20] sm:$0xff] %vm457, %v422
        %463 = vst.msk [vmem:[%s190 + $0x28] sm:$0xff] %vm457, %v425
        %464 = vst.msk [vmem:[%s190 + $0x30] sm:$0xff] %vm457, %v428
        %465 = vst.msk [vmem:[%s190 + $0x38] sm:$0xff] %vm457, %v431
        %466 = vst.msk [vmem:[%s190 + $0x40] sm:$0xff] %vm457, %v434
        %467 = vst.msk [vmem:[%s190 + $0x48] sm:$0xff] %vm457, %v437
        %468 = vst.msk [vmem:[%s190 + $0x50] sm:$0xff] %vm457, %v440
        %469 = vst.msk [vmem:[%s190 + $0x58] sm:$0xff] %vm457, %v443
        %470 = vst.msk [vmem:[%s190 + $0x60] sm:$0xff] %vm457, %v446
        %471 = vst.msk [vmem:[%s190 + $0x68] sm:$0xff] %vm457, %v449
        %472 = vst.msk [vmem:[%s190 + $0x70] sm:$0xff] %vm457, %v452
        %473 = vst.msk [vmem:[%s190 + $0x78] sm:$0xff] %vm457, %v455
        %s474 = sand.u32 %s109, 1
        %s475 = scalar_lea.sflag [#allocation3], %s474
        %s476 = sand.u32 %s109, 1
        %s477 = smul.addr %s476, 128
        %s478 = scalar_lea.vmem [#allocation2], %s477
        // Predicated region
        $region33: #{tpu_custom_call.1} parent=31 // pred_check
          %p479 = pneg %p119
        $region34: #{tpu_custom_call.1} parent=31 // pred_check_branch
          %481 = sbr.rel (%p479) target = $region36
        $region35: #{tpu_custom_call.1} parent=31 // pred_region
          %s482 = smul.u32 4, %s22
          %484 = vsyncadd %s475, 0
          %s485 = smul.addr %s482, 4
          %s486 = smul.addr %s21, 16
          %s487 = sadd.s32 %s485, %s486
          %s488 = smul.addr %s487, 8
          %s489 = scalar_lea.hbm %s3, %s488
          %s490 = sshll.u32 %s478, 4
          %s491 = int_to_ptr.vmem [resolvable:$true] %s490
          %s492 = sshll.u32 %s489, 4
          %s493 = int_to_ptr.hbm [resolvable:$true] %s492
          %498 = dma.vmem_to_hbm [thread:$0]  %s491, 2048, %s493, %s475, 128, 128, 8
        $region36: #{tpu_custom_call.1} parent=31 // pred_fallthru
          _
      $region32: #{tpu_custom_call.1} parent=5 // pred_fallthru
        _
      %p499 = scmp.le.s32.totalorder 2, %s12
      // Predicated region
      $region37: #{tpu_custom_call.1} parent=5 // pred_check
        %p500 = pneg %p499
      $region38: #{tpu_custom_call.1} parent=5 // pred_check_branch
        %502 = sbr.rel (%p500) target = $region40
      $region39: #{tpu_custom_call.1} parent=5 // pred_region
        %s503 = ssub.s32 %s12, 2
        // Predicated region
        $region41: #{tpu_custom_call.1} parent=39 // pred_check
          %p504 = pneg %p125
        $region42: #{tpu_custom_call.1} parent=39 // pred_check_branch
          %506 = sbr.rel (%p504) target = $region44
        $region43: #{tpu_custom_call.1} parent=39 // pred_region
          %s507 = sand.u32 %s110, 1
          %s508 = scalar_lea.sflag [#allocation3], %s507
          %s509 = sand.u32 %s110, 1
          %s510 = smul.addr %s509, 128
          %s511 = scalar_lea.vmem [#allocation2], %s510
          %513 = dma.done %s508, 2048
        $region44: #{tpu_custom_call.1} parent=39 // pred_fallthru
          _
      $region40: #{tpu_custom_call.1} parent=5 // pred_fallthru
        _
    $region6: #{tpu_custom_call.1} parent=1 // loop_footer
      %s16 = sadd.s32 1, %s12
    $region7: #{tpu_custom_call.1} parent=1 // loop_footer_branch
      %11 = sbr.rel target = $region3
    $region8: #{tpu_custom_call.1} parent=1 // loop_exit
      _
    %514 = vsyncpa [#allocation3], 1
    %s515 = scalar_lea.sflag [#allocation3], 1
    %516 = vsyncpa %s515, 1

</llo_original>
